<compile_context>
chip_gen: v6e
topology: v6e:2x2x1
jax: 0.10.0
libtpu: 0.0.40
codegen_flags: <defaults>
</compile_context>

<pallas_src>
import jax
import jax.numpy as jnp
from jax.experimental import pallas as pl
from jax.experimental.pallas import tpu as pltpu


# ----------------------------------------------------------------------------
# Glue: bilinear upsample matching F.interpolate(mode='bilinear',
# align_corners=False) on NCHW tensors (pure gather/re-weighting; stays in JAX).
# ----------------------------------------------------------------------------
def bilinear_upsample_nchw(x, out_h, out_w):
    N, C, H, W = x.shape
    scale_h = H / out_h
    scale_w = W / out_w

    src_y = jnp.maximum((jnp.arange(out_h, dtype=jnp.float32) + 0.5) * scale_h - 0.5, 0.0)
    src_x = jnp.maximum((jnp.arange(out_w, dtype=jnp.float32) + 0.5) * scale_w - 0.5, 0.0)

    y0f = jnp.floor(src_y)
    x0f = jnp.floor(src_x)
    wy = (src_y - y0f)[None, None, :, None]
    wx = (src_x - x0f)[None, None, None, :]

    y0 = jnp.clip(y0f, 0, H - 1).astype(jnp.int32)
    y1 = jnp.clip(y0f + 1, 0, H - 1).astype(jnp.int32)
    x0 = jnp.clip(x0f, 0, W - 1).astype(jnp.int32)
    x1 = jnp.clip(x0f + 1, 0, W - 1).astype(jnp.int32)

    rows = x[:, :, y0, :] * (1.0 - wy) + x[:, :, y1, :] * wy        # (N,C,out_h,W)
    out = rows[:, :, :, x0] * (1.0 - wx) + rows[:, :, :, x1] * wx   # (N,C,out_h,out_w)
    return out


# ----------------------------------------------------------------------------
# Tiling helpers: pixels-in-lanes layout, ragged last tile handled by padding.
# ----------------------------------------------------------------------------
_VMEM_LIMIT = 32 * 1024 * 1024  # >= every generation's default scoped limit,
                                # well under v7x's 64 MiB physical VMEM.


def _pad_and_tile(p, max_tile):
    """Pick (padded pixel count, lane-axis tile size) for a pixel axis of length p."""
    if p < 128:
        return p, p                       # full-dim block is always legal
    p_pad = -(-p // 128) * 128            # round up to a multiple of 128
    tile = 128
    cand = 256
    while cand <= min(p_pad, max_tile):   # largest multiple-of-128 divisor <= max_tile
        if p_pad % cand == 0:
            tile = cand
        cand += 128
    return p_pad, tile


def _pad_last(x, p_pad):
    p = x.shape[-1]
    if p_pad == p:
        return x
    pad = [(0, 0)] * (x.ndim - 1) + [(0, p_pad - p)]
    return jnp.pad(x, pad)


# ----------------------------------------------------------------------------
# Pallas kernels (channels in sublanes, pixels in lanes -> lane-dense output).
# ----------------------------------------------------------------------------
def _proj_kernel(w_ref, x_ref, o_ref):
    # w: (Co, Cin), x: (Cin, tile_p)  ->  o: (Co, tile_p)
    o_ref[...] = jnp.dot(w_ref[...], x_ref[...],
                         preferred_element_type=jnp.float32).astype(o_ref.dtype)


def _fuse_kernel(main_ref, side_ref, ws_ref, shift_ref, o_ref):
    # main: (Co, tile_p) upsampled, already-projected main branch (BN scale folded)
    # side: (Cs, tile_p); ws: (Co, Cs) effective side weight; shift: (Co, 1)
    z = jnp.dot(ws_ref[...], side_ref[...], preferred_element_type=jnp.float32)
    z = z + main_ref[...].astype(jnp.float32) + shift_ref[...]
    o_ref[...] = jnp.maximum(z, 0.0).astype(o_ref.dtype)


def conv1x1_cp_pallas(x, w_t, *, out_dtype=None, max_tile=2048):
    """1x1 conv in (C, P) layout: out[n] = w_t @ x[n].  x: (N,Cin,P), w_t: (Co,Cin)."""
    N, Cin, P = x.shape
    Co = w_t.shape[0]
    out_dtype = out_dtype or x.dtype
    p_pad, tile = _pad_and_tile(P, max_tile)
    xp = _pad_last(x, p_pad)

    out = pl.pallas_call(
        _proj_kernel,
        out_shape=jax.ShapeDtypeStruct((N, Co, p_pad), out_dtype),
        grid_spec=pltpu.PrefetchScalarGridSpec(
            num_scalar_prefetch=0,
            grid=(N, p_pad // tile),
            in_specs=[
                pl.BlockSpec((Co, Cin), lambda n, t: (0, 0)),          # resident weight
                pl.BlockSpec((None, Cin, tile), lambda n, t: (n, 0, t)),
            ],
            out_specs=pl.BlockSpec((None, Co, tile), lambda n, t: (n, 0, t)),
        ),
        compiler_params=pltpu.CompilerParams(
            dimension_semantics=("parallel", "parallel"),
            vmem_limit_bytes=_VMEM_LIMIT),
    )(w_t, xp)
    return out[:, :, :P] if p_pad != P else out


def fused_side_pallas(main_up, side, ws_t, shift, *, out_dtype=None, max_tile=2048):
    """out[n] = relu(main_up[n] + ws_t @ side[n] + shift) in lane-dense layout."""
    N, Co, P = main_up.shape
    _, Cs, _ = side.shape
    out_dtype = out_dtype or main_up.dtype
    p_pad, tile = _pad_and_tile(P, max_tile)
    main_p = _pad_last(main_up, p_pad)
    side_p = _pad_last(side, p_pad)

    out = pl.pallas_call(
        _fuse_kernel,
        out_shape=jax.ShapeDtypeStruct((N, Co, p_pad), out_dtype),
        grid_spec=pltpu.PrefetchScalarGridSpec(
            num_scalar_prefetch=0,
            grid=(N, p_pad // tile),
            in_specs=[
                pl.BlockSpec((None, Co, tile), lambda n, t: (n, 0, t)),
                pl.BlockSpec((None, Cs, tile), lambda n, t: (n, 0, t)),
                pl.BlockSpec((Co, Cs), lambda n, t: (0, 0)),           # resident weight
                pl.BlockSpec((Co, 1), lambda n, t: (0, 0)),            # resident shift
            ],
            out_specs=pl.BlockSpec((None, Co, tile), lambda n, t: (n, 0, t)),
        ),
        compiler_params=pltpu.CompilerParams(
            dimension_semantics=("parallel", "parallel"),
            vmem_limit_bytes=_VMEM_LIMIT),
    )(main_p, side_p, ws_t, shift)
    return out[:, :, :P] if p_pad != P else out


# ----------------------------------------------------------------------------
# Module wrapper (weight folding + layout glue, no transposes anywhere).
# ----------------------------------------------------------------------------
def prepare_effective_params(params):
    """Fold the 3 convs + BN scale into 2 effective weights (exact; done in f32)."""
    scale = params["bn_scale"].astype(jnp.float32)                               # (Co,)
    w_main_eff = (params["wm"].astype(jnp.float32)
                  @ params["wf_m"].astype(jnp.float32)) * scale[None, :]         # (Cm, Co)
    w_side_eff = (params["ws"].astype(jnp.float32)
                  @ params["wf_s"].astype(jnp.float32)) * scale[None, :]         # (Cs, Co)
    shift = params["bn_shift"].astype(jnp.float32).reshape(-1, 1)                # (Co, 1)
    return w_main_eff.T, w_side_eff.T, shift          # (Co, Cm), (Co, Cs), (Co, 1)


def crisp_upsample_forward(main_img, side_img, params, *,
                           act_dtype=jnp.float32, max_tile=2048):
    # main_img: (N, Cm, Hm, Wm)   side_img: (N, Cs, Hs, Ws)  -- NCHW like PyTorch
    N, Cm, Hm, Wm = main_img.shape
    _, Cs, Hs, Ws = side_img.shape
    wm_eff_t, ws_eff_t, shift = prepare_effective_params(params)
    Co = wm_eff_t.shape[0]

    # Main branch: folded 1x1 conv at LOW resolution (conv and bilinear resize
    # commute), then upsample the Co-channel result.  NCHW reshapes freely to (N,C,HW).
    main_flat = main_img.reshape(N, Cm, Hm * Wm).astype(act_dtype)
    main_proj = conv1x1_cp_pallas(main_flat, wm_eff_t.astype(act_dtype),
                                  out_dtype=jnp.float32, max_tile=max_tile)
    main_up = bilinear_upsample_nchw(main_proj.reshape(N, Co, Hm, Wm), Hs, Ws)
    main_up_flat = main_up.reshape(N, Co, Hs * Ws).astype(act_dtype)

    # Side branch + fuse + BN shift + ReLU, one lane-dense kernel.
    side_flat = side_img.reshape(N, Cs, Hs * Ws).astype(act_dtype)
    out_flat = fused_side_pallas(main_up_flat, side_flat,
                                 ws_eff_t.astype(act_dtype), shift,
                                 out_dtype=act_dtype, max_tile=max_tile)
    return out_flat.reshape(N, Co, Hs, Ws)


def make_params(key, main_channels, side_channels, out_channels):
    Cm2 = main_channels // 2
    Cs2 = side_channels // 2
    k = jax.random.split(key, 7)

    def xavier(rng, fan_in, fan_out):
        limit = jnp.sqrt(6.0 / (fan_in + fan_out))
        # stored as (Cin, Cout) so the 1x1 conv is a plain matmul
        return jax.random.uniform(rng, (fan_in, fan_out), jnp.float32, -limit, limit)

    wm = xavier(k[0], main_channels, Cm2)
    ws = xavier(k[1], side_channels, Cs2)
    wf = xavier(k[2], Cm2 + Cs2, out_channels)
    wf_m, wf_s = wf[:Cm2], wf[Cm2:]

    # SyncBN parameters (deterministic, inference mode — folded to scale/shift).
    # TODO(synk): training-mode SyncBN (batch statistics) not implemented; eval-mode running stats used.
    gamma = 1.0 + 0.1 * jax.random.normal(k[3], (out_channels,), jnp.float32)
    beta = 0.05 * jax.random.normal(k[4], (out_channels,), jnp.float32)
    running_mean = 0.1 * jax.random.normal(k[5], (out_channels,), jnp.float32)
    running_var = jnp.abs(1.0 + 0.1 * jax.random.normal(k[6], (out_channels,), jnp.float32))
    eps = 1e-5
    bn_scale = gamma / jnp.sqrt(running_var + eps)
    bn_shift = beta - running_mean * bn_scale

    return {"wm": wm, "ws": ws, "wf_m": wf_m, "wf_s": wf_s,
            "bn_scale": bn_scale, "bn_shift": bn_shift}


# ----------------------------------------------------------------------------
# Pure-JAX reference (unfolded path, matches the PyTorch module order).
# ----------------------------------------------------------------------------
def crisp_upsample_reference(main_img, side_img, params):
    _, _, Hs, Ws = side_img.shape
    main_up = bilinear_upsample_nchw(main_img, Hs, Ws)
    a = jnp.einsum("nchw,cd->ndhw", main_up, params["wm"])
    b = jnp.einsum("nchw,cd->ndhw", side_img, params["ws"])
    z = (jnp.einsum("nchw,cd->ndhw", a, params["wf_m"])
         + jnp.einsum("nchw,cd->ndhw", b, params["wf_s"]))
    z = z * params["bn_scale"][None, :, None, None] + params["bn_shift"][None, :, None, None]
    return jnp.maximum(z, 0.0)


if __name__ == "__main__":
    main_channels, side_channels, out_channels = 8, 4, 8
    N, Hm, Wm = 2, 8, 8          # main (low-res) feature map
    Hs, Ws = 16, 16              # side (high-res) feature map

    key = jax.random.PRNGKey(0)
    k_main, k_side, k_param = jax.random.split(key, 3)

    main_img = jax.random.normal(k_main, (N, main_channels, Hm, Wm), jnp.float32)
    side_img = jax.random.normal(k_side, (N, side_channels, Hs, Ws), jnp.float32)
    params = make_params(k_param, main_channels, side_channels, out_channels)

    out = crisp_upsample_forward(main_img, side_img, params)
    out = jax.block_until_ready(out)

    ref = crisp_upsample_reference(main_img, side_img, params)
    assert out.shape == (N, out_channels, Hs, Ws)
    assert jnp.allclose(out, ref, atol=1e-4, rtol=1e-4), "mismatch vs reference"

    # bf16 activation path (bandwidth-bound v6e/v7x): smoke test shape/finiteness.
    out_bf16 = crisp_upsample_forward(main_img, side_img, params,
                                      act_dtype=jnp.bfloat16)
    out_bf16 = jax.block_until_ready(out_bf16)
    assert out_bf16.shape == (N, out_channels, Hs, Ws)
    assert bool(jnp.all(jnp.isfinite(out_bf16.astype(jnp.float32))))

    print("KERNEL_OK")
</pallas_src>

<mosaic_0001>
module attributes {stable_mosaic.version = 11 : i64} {
  func.func @_proj_kernel(%arg0: i32, %arg1: i32, %arg2: memref<8x8xf32, #tpu.memory_space<vmem>>, %arg3: memref<1x8x64xf32, #tpu.memory_space<vmem>>, %arg4: memref<1x8x64xf32, #tpu.memory_space<vmem>>) attributes {dimension_semantics = [#tpu.dimension_semantics<parallel>, #tpu.dimension_semantics<parallel>], iteration_bounds = array<i64: 2, 1>, scalar_prefetch = 0 : i64, scratch_operands = 0 : i64, tpu.core_type = #tpu.core_type<tc>, window_params = [{pipeline_mode = #tpu.pipeline_mode<synchronous>, transform_indices = @transform_0, window_bounds = array<i64: 8, 8>}, {transform_indices = @transform_1, window_bounds = array<i64: 1, 8, 64>}, {transform_indices = @transform_2, window_bounds = array<i64: 1, 8, 64>}]} {
    %c0 = arith.constant 0 : index
    %c0_0 = arith.constant 0 : index
    %0 = vector.load %arg2[%c0, %c0_0] : memref<8x8xf32, #tpu.memory_space<vmem>>, vector<8x8xf32>
    %c0_1 = arith.constant 0 : index
    %c0_2 = arith.constant 0 : index
    %c0_3 = arith.constant 0 : index
    %1 = vector.load %arg3[%c0_1, %c0_2, %c0_3] : memref<1x8x64xf32, #tpu.memory_space<vmem>>, vector<1x8x64xf32>
    %2 = vector.shape_cast %1 : vector<1x8x64xf32> to vector<8x64xf32>
    %cst = arith.constant dense<0.000000e+00> : vector<8x64xf32>
    %3 = tpu.matmul %0, %2, %cst {dimension_numbers = #tpu.dot_dimension_numbers<[1], [0], [0], [1], [0, 0, 1, 1], [], []>} : vector<8x8xf32>, vector<8x64xf32>, vector<8x64xf32> -> vector<8x64xf32>
    %c0_4 = arith.constant 0 : index
    %c0_5 = arith.constant 0 : index
    %c0_6 = arith.constant 0 : index
    %4 = vector.load %arg4[%c0_4, %c0_5, %c0_6] : memref<1x8x64xf32, #tpu.memory_space<vmem>>, vector<1x8x64xf32>
    %5 = vector.shape_cast %4 : vector<1x8x64xf32> to vector<8x64xf32>
    %6 = vector.shape_cast %3 : vector<8x64xf32> to vector<1x8x64xf32>
    tpu.vector_store %arg4[%c0_4, %c0_5, %c0_6], %6 {strides = array<i32>} : memref<1x8x64xf32, #tpu.memory_space<vmem>>, vector<1x8x64xf32>,
    return
  }
  func.func @transform_0(%arg0: i32, %arg1: i32) -> (i32, i32) {
    %c0_i32 = arith.constant 0 : i32
    %c0_i32_0 = arith.constant 0 : i32
    %c0_i32_1 = arith.constant 0 : i32
    return %c0_i32, %c0_i32_0 : i32, i32
  }
  func.func @transform_1(%arg0: i32, %arg1: i32) -> (i32, i32, i32) {
    %c0_i32 = arith.constant 0 : i32
    %c0_i32_0 = arith.constant 0 : i32
    return %arg0, %c0_i32, %arg1 : i32, i32, i32
  }
  func.func @transform_2(%arg0: i32, %arg1: i32) -> (i32, i32, i32) {
    %c0_i32 = arith.constant 0 : i32
    %c0_i32_0 = arith.constant 0 : i32
    return %arg0, %c0_i32, %arg1 : i32, i32, i32
  }
}

</mosaic_0001>

<llo_original>
// kernel: tpu_custom_call.1
$region0: #{tpu_custom_call.1}
  #allocation0 [shape = 'u32[]', space=smem, size = 0x4, offset = 0x4, fixed_abs, tag = 'smem constant byte address 0x4 - core index']
  #allocation1 [shape = 'u32[144,128]{1,0:T(1,128)}', space=vmem, size = 0x12000, scoped, tag = 'internal scratch']
  %s0 = inlined_call_operand.hbm [shape: f32[8,8], index: 0, kind: input, shape index: {}]
  %s1 = inlined_call_operand.hbm [shape: f32[2,8,64], index: 1, kind: input, shape index: {}]
  %s2 = inlined_call_operand.hbm [shape: f32[2,8,64], index: 2, kind: output, shape index: {}]
  %s3 = sld [smem:[#allocation0]]
  $region49: #{tpu_custom_call.1} parent=0
    _
  %s5 = ssub.s32 1, %s3
  %s6 = scalar_select 0, %s5, %s3
  $region1: #{tpu_custom_call.1} parent=0
    #allocation2 [shape = 'u8[4096]{0}', space=vmem, size = 0x1000, scoped, tag = 'input window, operand 0, single buffered']
    #allocation3 [shape = 's32[2]{0}', space=sflag, size = 0x8, scoped, tag = 'scoped memory for tpu_custom_call.1']
    #allocation4 [shape = 's32[2]{0}', space=sflag, size = 0x8, scoped, tag = 'scoped memory for tpu_custom_call.1']
    #allocation5 [shape = 'u8[8192]{0}', space=vmem, size = 0x2000, scoped, tag = 'input window, operand 1']
    #allocation6 [shape = 's32[2]{0}', space=sflag, size = 0x8, scoped, tag = 'scoped memory for tpu_custom_call.1']
    #allocation7 [shape = 'u8[8192]{0}', space=vmem, size = 0x2000, scoped, tag = 'output window, operand 0']
    %7 = vsyncpa [#allocation3], 0
    %8 = vsyncpa [#allocation6], 0
    %s9 = scalar_lea.sflag [#allocation6], 1
    %10 = vsyncpa %s9, 0
    %11 = vsyncpa [#allocation4], 0
    %s12 = scalar_lea.sflag [#allocation4], 1
    %13 = vsyncpa %s12, 0
    loop: start=0, step=1, limit=4
    $region2: #{tpu_custom_call.1} parent=1 // loop_pre_header
      _
    $region3: #{tpu_custom_call.1} parent=1 // loop_header
      %s15 = sphi 0, %s19
      %p16 = scmp.ge.s32.totalorder %s15, 4
      %s22 = sphi 0, %s34
      %s23 = sphi 0, %s30
      %s24 = sphi 0, %s22
      %s25 = sphi 0, %s23
      %s26 = sphi 0, %s24
      %s27 = sphi 0, %s25
      %s35 = sphi 0, %s35
      %s37 = sphi 0, %s35
      %s38 = sphi 0, %s37
      %s52 = sphi 0, %s38
      %s60 = sphi 0, %s62
      %s63 = sphi 0, %s60
      %s64 = sphi 0, %s63
      %s80 = sphi 0, %s64
      %s88 = sphi 0, %s90
      %s91 = sphi 0, %s88
      %s92 = sphi 0, %s91
      %s108 = sphi 0, %s92
    $region4: #{tpu_custom_call.1} parent=1 // loop_header_branch
      %18 = sbr.rel (%p16) target = $region8
    $region5: #{tpu_custom_call.1} parent=1 // loop_body
      %s20 = ssub.s32 %s15, 1
      %s21 = ssub.s32 %s15, 2
      %s28 = sadd.s32 1, %s23
      %p29 = scmp.ge.s32.totalorder %s28, 1
      %s30 = scalar_select %p29, 0, %s28
      %s31 = sadd.s32 1, %s22
      %s32 = scalar_select %p29, %s31, %s22
      %p33 = scmp.ge.s32.totalorder %s32, 2
      %s34 = scalar_select %p33, 0, %s32
      %s36 = sadd.s32 %s35, 1
      %p39 = scmp.eq.s32.totalorder %s15, 1
      %p40 = scmp.ne.s32.totalorder %s35, %s37
      %p41 = scmp.eq.s32.totalorder %s15, 0
      %p42 = por %p40, %p41
      %p43 = scmp.ne.s32.totalorder %s35, %s37
      %p44 = scmp.eq.s32.totalorder %s20, 1
      %p45 = por %p43, %p44
      %p46 = scmp.ne.s32.totalorder %s37, %s38
      %p47 = scmp.eq.s32.totalorder %s20, 0
      %p48 = por %p46, %p47
      %p49 = scmp.ne.s32.totalorder %s37, %s38
      %p50 = scmp.eq.s32.totalorder %s21, 1
      %p51 = por %p49, %p50
      %p53 = scmp.ne.s32.totalorder %s38, %s52
      %p54 = scmp.eq.s32.totalorder %s21, 0
      %p55 = por %p53, %p54
      %s56 = ssub.s32 %s22, %s34
      %s57 = ssub.s32 %s23, %s30
      %s58 = sor.u32 %s56, %s57
      %p59 = scmp.eq.s32.totalorder %s58, 0
      %s61 = sadd.s32 %s60, 1
      %s62 = scalar_select %p59, %s60, %s61
      %p65 = pneg %p59
      %p66 = scmp.eq.s32.totalorder %s15, 1
      %p67 = por %p65, %p66
      %p68 = scmp.ne.s32.totalorder %s60, %s63
      %p69 = scmp.eq.s32.totalorder %s15, 0
      %p70 = por %p68, %p69
      %p71 = scmp.ne.s32.totalorder %s60, %s63
      %p72 = scmp.eq.s32.totalorder %s20, 1
      %p73 = por %p71, %p72
      %p74 = scmp.ne.s32.totalorder %s63, %s64
      %p75 = scmp.eq.s32.totalorder %s20, 0
      %p76 = por %p74, %p75
      %p77 = scmp.ne.s32.totalorder %s63, %s64
      %p78 = scmp.eq.s32.totalorder %s21, 1
      %p79 = por %p77, %p78
      %p81 = scmp.ne.s32.totalorder %s64, %s80
      %p82 = scmp.eq.s32.totalorder %s21, 0
      %p83 = por %p81, %p82
      %s84 = ssub.s32 %s22, %s34
      %s85 = ssub.s32 %s23, %s30
      %s86 = sor.u32 %s84, %s85
      %p87 = scmp.eq.s32.totalorder %s86, 0
      %s89 = sadd.s32 %s88, 1
      %s90 = scalar_select %p87, %s88, %s89
      %p93 = pneg %p87
      %p94 = scmp.eq.s32.totalorder %s15, 1
      %p95 = por %p93, %p94
      %p96 = scmp.ne.s32.totalorder %s88, %s91
      %p97 = scmp.eq.s32.totalorder %s15, 0
      %p98 = por %p96, %p97
      %p99 = scmp.ne.s32.totalorder %s88, %s91
      %p100 = scmp.eq.s32.totalorder %s20, 1
      %p101 = por %p99, %p100
      %p102 = scmp.ne.s32.totalorder %s91, %s92
      %p103 = scmp.eq.s32.totalorder %s20, 0
      %p104 = por %p102, %p103
      %p105 = scmp.ne.s32.totalorder %s91, %s92
      %p106 = scmp.eq.s32.totalorder %s21, 1
      %p107 = por %p105, %p106
      %p109 = scmp.ne.s32.totalorder %s92, %s108
      %p110 = scmp.eq.s32.totalorder %s21, 0
      %p111 = por %p109, %p110
      %p112 = scmp.le.s32.totalorder 1, %s15
      %p113 = scmp.lt.s32.totalorder %s15, 3
      %p114 = pnand %p112, %p113
      %p115 = pneg %p114
      // Predicated region
      $region9: #{tpu_custom_call.1} parent=5 // pred_check
        _
      $region10: #{tpu_custom_call.1} parent=5 // pred_check_branch
        %117 = sbr.rel (%p114) target = $region12
      $region11: #{tpu_custom_call.1} parent=5 // pred_region
        %s118 = ssub.s32 %s15, 1
        // Predicated region
        $region13: #{tpu_custom_call.1} parent=11 // pred_check
          %p119 = pneg %p48
        $region14: #{tpu_custom_call.1} parent=11 // pred_check_branch
          %121 = sbr.rel (%p119) target = $region16
        $region15: #{tpu_custom_call.1} parent=11 // pred_region
          %s123 = ssub.s32 128, 128
          %124 = vsyncadd [#allocation3], %s123
          %s126 = sshll.u32 [#allocation2], 4
          %s127 = int_to_ptr.vmem [resolvable:$true] %s126
          %129 = dma.hbm_to_vmem [thread:$0]  %s0, 128, %s127, [#allocation3]
        $region16: #{tpu_custom_call.1} parent=11 // pred_fallthru
          _
      $region12: #{tpu_custom_call.1} parent=5 // pred_fallthru
        _
      %p130 = scmp.lt.s32.totalorder %s15, 2
      // Predicated region
      $region17: #{tpu_custom_call.1} parent=5 // pred_check
        %p131 = pneg %p130
      $region18: #{tpu_custom_call.1} parent=5 // pred_check_branch
        %133 = sbr.rel (%p131) target = $region20
      $region19: #{tpu_custom_call.1} parent=5 // pred_region
        // Predicated region
        $region21: #{tpu_custom_call.1} parent=19 // pred_check
          %p134 = pneg %p70
        $region22: #{tpu_custom_call.1} parent=19 // pred_check_branch
          %136 = sbr.rel (%p134) target = $region24
        $region23: #{tpu_custom_call.1} parent=19 // pred_region
          %s137 = sand.u32 %s60, 1
          %s138 = scalar_lea.sflag [#allocation6], %s137
          %s139 = sand.u32 %s60, 1
          %s140 = smul.addr %s139, 8
          %s141 = scalar_lea.vmem [#allocation5], %s140
          %s143 = ssub.s32 128, 128
          %144 = vsyncadd %s138, %s143
          %s145 = sadd.s32 %s23, %s22
          %s146 = smul.addr %s145, 128
          %s147 = scalar_lea.hbm %s1, %s146
          %s149 = sshll.u32 %s141, 4
          %s150 = int_to_ptr.vmem [resolvable:$true] %s149
          %152 = dma.hbm_to_vmem [thread:$0]  %s147, 128, %s150, %s138
        $region24: #{tpu_custom_call.1} parent=19 // pred_fallthru
          _
      $region20: #{tpu_custom_call.1} parent=5 // pred_fallthru
        _
      %p153 = scmp.le.s32.totalorder 1, %s15
      %p154 = scmp.lt.s32.totalorder %s15, 3
      %p155 = pnand %p153, %p154
      %p156 = pneg %p155
      // Predicated region
      $region25: #{tpu_custom_call.1} parent=5 // pred_check
        _
      $region26: #{tpu_custom_call.1} parent=5 // pred_check_branch
        %158 = sbr.rel (%p155) target = $region28
      $region27: #{tpu_custom_call.1} parent=5 // pred_region
        %s159 = ssub.s32 %s15, 1
        // Predicated region
        $region29: #{tpu_custom_call.1} parent=27 // pred_check
          %p160 = pneg %p48
        $region30: #{tpu_custom_call.1} parent=27 // pred_check_branch
          %162 = sbr.rel (%p160) target = $region32
        $region31: #{tpu_custom_call.1} parent=27 // pred_region
          %163 = dma.done [#allocation3], 128
        $region32: #{tpu_custom_call.1} parent=27 // pred_fallthru
          _
        %s164 = sand.u32 %s63, 1
        %s165 = scalar_lea.sflag [#allocation6], %s164
        %s166 = sand.u32 %s63, 1
        %s167 = smul.addr %s166, 8
        %s168 = scalar_lea.vmem [#allocation5], %s167
        // Predicated region
        $region33: #{tpu_custom_call.1} parent=27 // pred_check
          %p169 = pneg %p76
        $region34: #{tpu_custom_call.1} parent=27 // pred_check_branch
          %171 = sbr.rel (%p169) target = $region36
        $region35: #{tpu_custom_call.1} parent=27 // pred_region
          %172 = dma.done %s165, 128
        $region36: #{tpu_custom_call.1} parent=27 // pred_fallthru
          _
        %p173 = pneg %p48
        %p174 = pneg %p45
        %s175 = sand.u32 %s63, 1
        %s176 = scalar_lea.sflag [#allocation6], %s175
        %s177 = sand.u32 %s63, 1
        %s178 = smul.addr %s177, 8
        %s179 = scalar_lea.vmem [#allocation5], %s178
        %p180 = pneg %p76
        %p181 = pneg %p73
        %p182 = pneg %p104
        %p183 = pneg %p101
        %s184 = sand.u32 %s91, 1
        %s185 = scalar_lea.sflag [#allocation4], %s184
        %s186 = sand.u32 %s91, 1
        %s187 = smul.addr %s186, 8
        %s188 = scalar_lea.vmem [#allocation7], %s187
        %v189 = vld [vmem:[#allocation2] sm:$0xff]
        %v190 = vld [vmem:[%s168] sm:$0xff]
        %vm191 = vcmask 64512
        %v193 = vsel %vm191, %v189, 0
        %195 = vmatprep.subr.mxu0 0.0
        %196 = vmatpush1.msra.mxu0 0.0
        %197 = vmatprep.subr.mxu0 0.0
        %198 = vmatpush1.msra.mxu0 0.0
        %199 = vmatprep.subr.mxu0 0.0
        %200 = vmatpush1.msra.mxu0 0.0
        %201 = vmatprep.subr.mxu0 0.0
        %202 = vmatpush1.msra.mxu0 0.0
        %203 = vmatprep.subr.mxu0 0.0
        %204 = vmatpush1.msra.mxu0 0.0
        %205 = vmatprep.subr.mxu0 0.0
        %206 = vmatpush1.msra.mxu0 0.0
        %207 = vmatprep.subr.mxu0 0.0
        %208 = vmatpush1.msra.mxu0 0.0
        %209 = vmatprep.subr.mxu0 0.0
        %210 = vmatpush1.msra.mxu0 0.0
        %211 = vmatprep.subr.mxu0 0.0
        %212 = vmatpush1.msra.mxu0 0.0
        %213 = vmatprep.subr.mxu0 0.0
        %214 = vmatpush1.msra.mxu0 0.0
        %215 = vmatprep.subr.mxu0 0.0
        %216 = vmatpush1.msra.mxu0 0.0
        %217 = vmatprep.subr.mxu0 0.0
        %218 = vmatpush1.msra.mxu0 0.0
        %219 = vmatprep.subr.mxu0 0.0
        %220 = vmatpush1.msra.mxu0 0.0
        %221 = vmatprep.subr.mxu0 0.0
        %222 = vmatpush1.msra.mxu0 0.0
        %223 = vmatprep.subr.mxu0 0.0
        %224 = vmatpush1.msra.mxu0 0.0
        %225 = vmatprep.subr.mxu0 0.0
        %226 = vmatpush1.msra.mxu0 %v190
        %227 = vmatprep.subr.mxu0 0.0
        %228 = vmatpush2.msra.mxu0 0.0
        %229 = vmatprep.subr.mxu0 0.0
        %230 = vmatpush2.msra.mxu0 0.0
        %231 = vmatprep.subr.mxu0 0.0
        %232 = vmatpush2.msra.mxu0 0.0
        %233 = vmatprep.subr.mxu0 0.0
        %234 = vmatpush2.msra.mxu0 0.0
        %235 = vmatprep.subr.mxu0 0.0
        %236 = vmatpush2.msra.mxu0 0.0
        %237 = vmatprep.subr.mxu0 0.0
        %238 = vmatpush2.msra.mxu0 0.0
        %239 = vmatprep.subr.mxu0 0.0
        %240 = vmatpush2.msra.mxu0 0.0
        %241 = vmatprep.subr.mxu0 0.0
        %242 = vmatpush2.msra.mxu0 0.0
        %243 = vmatprep.subr.mxu0 0.0
        %244 = vmatpush2.msra.mxu0 0.0
        %245 = vmatprep.subr.mxu0 0.0
        %246 = vmatpush2.msra.mxu0 0.0
        %247 = vmatprep.subr.mxu0 0.0
        %248 = vmatpush2.msra.mxu0 0.0
        %249 = vmatprep.subr.mxu0 0.0
        %250 = vmatpush2.msra.mxu0 0.0
        %251 = vmatprep.subr.mxu0 0.0
        %252 = vmatpush2.msra.mxu0 0.0
        %253 = vmatprep.subr.mxu0 0.0
        %254 = vmatpush2.msra.mxu0 0.0
        %255 = vmatprep.subr.mxu0 0.0
        %256 = vmatpush2.msra.mxu0 0.0
        %257 = vmatprep.subr.mxu0 0.0
        %258 = vmatpush2.msra.mxu0 0.0
        %259 = vmatprep.mubr.f32.mxu0 0.0
        %260 = vmatmul.mubr.f32.gmra.mxu0 %v193
        %v261 = vpop.f32.mrf.mxu0
        %v262 = vadd.f32 0.0, %v261
        %v263 = vpop.f32.mrf.mxu0
        %264 = vdwg.mxu0
        %vm265 = vcmask 523264
        %266 = vst.msk [vmem:[%s188] sm:$0xff] %vm265, %v262
        %s267 = sand.u32 %s91, 1
        %s268 = scalar_lea.sflag [#allocation4], %s267
        %s269 = sand.u32 %s91, 1
        %s270 = smul.addr %s269, 8
        %s271 = scalar_lea.vmem [#allocation7], %s270
        // Predicated region
        $region37: #{tpu_custom_call.1} parent=27 // pred_check
          %p272 = pneg %p101
        $region38: #{tpu_custom_call.1} parent=27 // pred_check_branch
          %274 = sbr.rel (%p272) target = $region40
        $region39: #{tpu_custom_call.1} parent=27 // pred_region
          %s276 = ssub.s32 128, 128
          %277 = vsyncadd %s268, %s276
          %s278 = sadd.s32 %s25, %s24
          %s279 = smul.addr %s278, 128
          %s280 = scalar_lea.hbm %s2, %s279
          %s282 = sshll.u32 %s271, 4
          %s283 = int_to_ptr.vmem [resolvable:$true] %s282
          %285 = dma.vmem_to_hbm [thread:$0]  %s283, 128, %s280, %s268
        $region40: #{tpu_custom_call.1} parent=27 // pred_fallthru
          _
      $region28: #{tpu_custom_call.1} parent=5 // pred_fallthru
        _
      %p286 = scmp.le.s32.totalorder 2, %s15
      // Predicated region
      $region41: #{tpu_custom_call.1} parent=5 // pred_check
        %p287 = pneg %p286
      $region42: #{tpu_custom_call.1} parent=5 // pred_check_branch
        %289 = sbr.rel (%p287) target = $region44
      $region43: #{tpu_custom_call.1} parent=5 // pred_region
        %s290 = ssub.s32 %s15, 2
        // Predicated region
        $region45: #{tpu_custom_call.1} parent=43 // pred_check
          %p291 = pneg %p107
        $region46: #{tpu_custom_call.1} parent=43 // pred_check_branch
          %293 = sbr.rel (%p291) target = $region48
        $region47: #{tpu_custom_call.1} parent=43 // pred_region
          %s294 = sand.u32 %s92, 1
          %s295 = scalar_lea.sflag [#allocation4], %s294
          %s296 = sand.u32 %s92, 1
          %s297 = smul.addr %s296, 8
          %s298 = scalar_lea.vmem [#allocation7], %s297
          %299 = dma.done %s295, 128
        $region48: #{tpu_custom_call.1} parent=43 // pred_fallthru
          _
      $region44: #{tpu_custom_call.1} parent=5 // pred_fallthru
        _
    $region6: #{tpu_custom_call.1} parent=1 // loop_footer
      %s19 = sadd.s32 1, %s15
    $region7: #{tpu_custom_call.1} parent=1 // loop_footer_branch
      %14 = sbr.rel target = $region3
    $region8: #{tpu_custom_call.1} parent=1 // loop_exit
      _
    %300 = vsyncpa [#allocation3], 1
    %s301 = scalar_lea.sflag [#allocation3], 1
    %302 = vsyncpa %s301, 1
    %303 = vsyncpa [#allocation6], 1
    %s304 = scalar_lea.sflag [#allocation6], 1
    %305 = vsyncpa %s304, 1
    %306 = vsyncpa [#allocation4], 1
    %s307 = scalar_lea.sflag [#allocation4], 1
    %308 = vsyncpa %s307, 1

</llo_original>
